<compile_context>
chip_gen: v7x
topology: tpu7x:2x2x1
jax: 0.10.0
libtpu: 0.0.40
codegen_flags: <defaults>
</compile_context>

<pallas_src>
import jax
import jax.numpy as jnp
from jax.experimental import pallas as pl
from jax.experimental.pallas import tpu as pltpu


_HIDDEN = 128
_OUT_FEATURES = 64


def _mlp_kernel(x_ref, w1_ref, b1_ref, w2_ref, b2_ref, w3_ref, b3_ref, o_ref):
    """One tm-row batch tile of the MLP; parameters are VMEM-resident."""
    x = x_ref[...]                                            # (tm, 1) f32

    # Layer 1: Linear(1, 128) + ReLU.  K=1 matmul == broadcasted outer
    # product, so keep it on the VPU (co-issues beside MXU work).
    h1 = jnp.maximum(x * w1_ref[...] + b1_ref[...], 0.0)      # (tm, 128) f32

    # Layer 2: Linear(128, 128) + ReLU on the MXU (f32 accumulation).
    h2 = jnp.dot(h1.astype(w2_ref.dtype), w2_ref[...],
                 preferred_element_type=jnp.float32)
    h2 = jnp.maximum(h2 + b2_ref[...], 0.0)                   # (tm, 128) f32

    # Layer 3: Linear(128, 64) on the MXU, then sigmoid.  Output block is
    # (tm, 64) -- unpadded, so HBM writeback is only the real 64 columns.
    h3 = jnp.dot(h2.astype(w3_ref.dtype), w3_ref[...],
                 preferred_element_type=jnp.float32)
    o_ref[...] = jax.nn.sigmoid(h3 + b3_ref[...]).astype(o_ref.dtype)


def prepare_params(params, *, mxu_dtype=jnp.bfloat16):
    """One-time parameter prep (hoisted out of the forward path).

    Casts the two MXU weights to `mxu_dtype`; biases and the K=1 layer-1
    weight stay f32 (element-wise math stays on the f32 VPU path).
    """
    w1, b1, w2, b2, w3, b3 = params
    return (w1, b1, w2.astype(mxu_dtype), b2, w3.astype(mxu_dtype), b3)


def linear_annealer_forward(x, prepared_params, *, tm=4096,
                            out_dtype=jnp.float32):
    """x: (B, 1) float32 -> (B, 64) `out_dtype`.

    `prepared_params` must come from prepare_params() (weight casts hoisted).
    """
    w1, b1, w2, b2, w3, b3 = prepared_params
    B = x.shape[0]
    out_features = w3.shape[1]

    # Batch tiling: tm a multiple of 8, no larger than the padded batch.
    tm = max(8, min(tm, pl.cdiv(B, 8) * 8))
    # At large B keep nb >= 2 so the "parallel" batch axis can split across
    # v7x's two TensorCores (one grid step would leave a core idle).
    if B >= 2048 and pl.cdiv(B, tm) < 2:
        tm = max(8, pl.cdiv(pl.cdiv(B, 2), 8) * 8)

    b_pad = pl.cdiv(B, tm) * tm
    if b_pad != B:
        x = jnp.pad(x, ((0, b_pad - B), (0, 0)))
    nb = b_pad // tm

    rows = lambda i: (i, 0)     # x / out tiles march over the batch
    fixed = lambda i: (0, 0)    # weights & biases stay resident in VMEM

    out = pl.pallas_call(
        _mlp_kernel,
        out_shape=jax.ShapeDtypeStruct((b_pad, out_features), out_dtype),
        grid=(nb,),
        in_specs=[
            # (tm, 1) x block: lane-minor dim 1 is padded to 128 lanes in
            # VMEM (~tm*512 B per buffer) -- budgeted for in the default tm.
            pl.BlockSpec((tm, 1), rows),
            pl.BlockSpec(w1.shape, fixed),      # (1, 128)   f32
            pl.BlockSpec(b1.shape, fixed),      # (1, 128)   f32
            pl.BlockSpec(w2.shape, fixed),      # (128, 128) bf16/f32
            pl.BlockSpec(b2.shape, fixed),      # (1, 128)   f32
            pl.BlockSpec(w3.shape, fixed),      # (128, 64)  bf16/f32
            pl.BlockSpec(b3.shape, fixed),      # (1, 64)    f32
        ],
        # Last dim 64 equals the full array extent -> legal, unpadded store.
        out_specs=pl.BlockSpec((tm, out_features), rows),
        compiler_params=pltpu.CompilerParams(
            dimension_semantics=("parallel",),
            vmem_limit_bytes=32 * 1024 * 1024,
        ),
    )(x, w1, b1, w2, b2, w3, b3)

    return out[:B] if b_pad != B else out


def init_params(key):
    """Deterministic synthetic init matching nn.Linear shapes.

    PyTorch stores Linear weights as (out, in); we keep the transposed
    (in, out) layout so the kernel computes x @ W + b directly.
    Biases are kept 2-D (1, out) for clean TPU lane layout.
    """
    k1, k2, k3, k4, k5, k6 = jax.random.split(key, 6)

    def uinit(k, shape, fan_in):
        bound = 1.0 / jnp.sqrt(fan_in)
        return jax.random.uniform(k, shape, jnp.float32, -bound, bound)

    w1 = uinit(k1, (1, _HIDDEN), 1)
    b1 = uinit(k2, (1, _HIDDEN), 1)
    w2 = uinit(k3, (_HIDDEN, _HIDDEN), _HIDDEN)
    b2 = uinit(k4, (1, _HIDDEN), _HIDDEN)
    w3 = uinit(k5, (_HIDDEN, _OUT_FEATURES), _HIDDEN)
    b3 = uinit(k6, (1, _OUT_FEATURES), _HIDDEN)
    return (w1, b1, w2, b2, w3, b3)


def reference_forward(x, params):
    """Pure-JAX f32 reference for correctness checking."""
    w1, b1, w2, b2, w3, b3 = params
    h = jnp.maximum(x @ w1 + b1, 0.0)
    h = jnp.maximum(h @ w2 + b2, 0.0)
    return jax.nn.sigmoid(h @ w3 + b3)


if __name__ == "__main__":
    key = jax.random.PRNGKey(0)
    pkey, xkey = jax.random.split(key)
    params = init_params(pkey)

    batch = 8
    x = jax.random.normal(xkey, (batch, 1), jnp.float32)

    ref = reference_forward(x, params)

    # f32 MXU-operand path: close parity with the pure-JAX reference.
    params_f32 = prepare_params(params, mxu_dtype=jnp.float32)
    out_f32 = jax.block_until_ready(linear_annealer_forward(x, params_f32))
    assert out_f32.shape == (batch, _OUT_FEATURES), out_f32.shape
    assert jnp.allclose(out_f32, ref, atol=1e-3, rtol=1e-3), \
        "f32 path mismatch vs reference"

    # bf16 MXU operands + f32 accumulation (the fast path on v5e/v6e/v7x);
    # looser tolerance against the f32 reference (sigmoid output in [0, 1]).
    params_bf16 = prepare_params(params, mxu_dtype=jnp.bfloat16)
    out_bf16 = jax.block_until_ready(linear_annealer_forward(x, params_bf16))
    assert out_bf16.shape == (batch, _OUT_FEATURES), out_bf16.shape
    assert jnp.allclose(out_bf16, ref, atol=3e-2, rtol=3e-2), \
        "bf16 path mismatch vs reference"

    print("KERNEL_OK")
</pallas_src>

<mosaic_0001>
module attributes {stable_mosaic.version = 11 : i64} {
  func.func @_mlp_kernel(%arg0: i32, %arg1: memref<8x1xf32, #tpu.memory_space<vmem>>, %arg2: memref<1x128xf32, #tpu.memory_space<vmem>>, %arg3: memref<1x128xf32, #tpu.memory_space<vmem>>, %arg4: memref<128x128xf32, #tpu.memory_space<vmem>>, %arg5: memref<1x128xf32, #tpu.memory_space<vmem>>, %arg6: memref<128x64xf32, #tpu.memory_space<vmem>>, %arg7: memref<1x64xf32, #tpu.memory_space<vmem>>, %arg8: memref<8x64xf32, #tpu.memory_space<vmem>>) attributes {dimension_semantics = [#tpu.dimension_semantics<parallel>], iteration_bounds = array<i64: 1>, scalar_prefetch = 0 : i64, scratch_operands = 0 : i64, tpu.core_type = #tpu.core_type<tc>, window_params = [{transform_indices = @transform_0, window_bounds = array<i64: 8, 1>}, {pipeline_mode = #tpu.pipeline_mode<synchronous>, transform_indices = @transform_1, window_bounds = array<i64: 1, 128>}, {pipeline_mode = #tpu.pipeline_mode<synchronous>, transform_indices = @transform_2, window_bounds = array<i64: 1, 128>}, {pipeline_mode = #tpu.pipeline_mode<synchronous>, transform_indices = @transform_3, window_bounds = array<i64: 128, 128>}, {pipeline_mode = #tpu.pipeline_mode<synchronous>, transform_indices = @transform_4, window_bounds = array<i64: 1, 128>}, {pipeline_mode = #tpu.pipeline_mode<synchronous>, transform_indices = @transform_5, window_bounds = array<i64: 128, 64>}, {pipeline_mode = #tpu.pipeline_mode<synchronous>, transform_indices = @transform_6, window_bounds = array<i64: 1, 64>}, {transform_indices = @transform_7, window_bounds = array<i64: 8, 64>}]} {
    %c0 = arith.constant 0 : index
    %c0_0 = arith.constant 0 : index
    %0 = vector.load %arg1[%c0, %c0_0] : memref<8x1xf32, #tpu.memory_space<vmem>>, vector<8x1xf32>
    %c0_1 = arith.constant 0 : index
    %c0_2 = arith.constant 0 : index
    %1 = vector.load %arg2[%c0_1, %c0_2] : memref<1x128xf32, #tpu.memory_space<vmem>>, vector<1x128xf32>
    %2 = vector.broadcast %0 : vector<8x1xf32> to vector<8x128xf32>
    %3 = vector.broadcast %1 : vector<1x128xf32> to vector<8x128xf32>
    %4 = arith.mulf %2, %3 : vector<8x128xf32>
    %c0_3 = arith.constant 0 : index
    %c0_4 = arith.constant 0 : index
    %5 = vector.load %arg3[%c0_3, %c0_4] : memref<1x128xf32, #tpu.memory_space<vmem>>, vector<1x128xf32>
    %6 = vector.broadcast %5 : vector<1x128xf32> to vector<8x128xf32>
    %7 = arith.addf %4, %6 : vector<8x128xf32>
    %cst = arith.constant 0.000000e+00 : f32
    %8 = vector.broadcast %cst : f32 to vector<8x128xf32>
    %9 = arith.maximumf %7, %8 : vector<8x128xf32>
    %c0_5 = arith.constant 0 : index
    %c0_6 = arith.constant 0 : index
    %10 = vector.load %arg4[%c0_5, %c0_6] : memref<128x128xf32, #tpu.memory_space<vmem>>, vector<128x128xf32>
    %cst_7 = arith.constant dense<0.000000e+00> : vector<8x128xf32>
    %11 = tpu.matmul %9, %10, %cst_7 {dimension_numbers = #tpu.dot_dimension_numbers<[1], [0], [0], [1], [0, 0, 1, 1], [], []>} : vector<8x128xf32>, vector<128x128xf32>, vector<8x128xf32> -> vector<8x128xf32>
    %c0_8 = arith.constant 0 : index
    %c0_9 = arith.constant 0 : index
    %12 = vector.load %arg5[%c0_8, %c0_9] : memref<1x128xf32, #tpu.memory_space<vmem>>, vector<1x128xf32>
    %13 = vector.broadcast %12 : vector<1x128xf32> to vector<8x128xf32>
    %14 = arith.addf %11, %13 : vector<8x128xf32>
    %cst_10 = arith.constant 0.000000e+00 : f32
    %15 = vector.broadcast %cst_10 : f32 to vector<8x128xf32>
    %16 = arith.maximumf %14, %15 : vector<8x128xf32>
    %c0_11 = arith.constant 0 : index
    %c0_12 = arith.constant 0 : index
    %17 = vector.load %arg6[%c0_11, %c0_12] : memref<128x64xf32, #tpu.memory_space<vmem>>, vector<128x64xf32>
    %cst_13 = arith.constant dense<0.000000e+00> : vector<8x64xf32>
    %18 = tpu.matmul %16, %17, %cst_13 {dimension_numbers = #tpu.dot_dimension_numbers<[1], [0], [0], [1], [0, 0, 1, 1], [], []>} : vector<8x128xf32>, vector<128x64xf32>, vector<8x64xf32> -> vector<8x64xf32>
    %c0_14 = arith.constant 0 : index
    %c0_15 = arith.constant 0 : index
    %19 = vector.load %arg7[%c0_14, %c0_15] : memref<1x64xf32, #tpu.memory_space<vmem>>, vector<1x64xf32>
    %20 = vector.broadcast %19 : vector<1x64xf32> to vector<8x64xf32>
    %21 = arith.addf %18, %20 : vector<8x64xf32>
    %22 = arith.negf %21 : vector<8x64xf32>
    %23 = math.exp %22 : vector<8x64xf32>
    %cst_16 = arith.constant 1.000000e+00 : f32
    %24 = vector.broadcast %cst_16 : f32 to vector<8x64xf32>
    %25 = arith.addf %24, %23 : vector<8x64xf32>
    %26 = arith.divf %24, %25 : vector<8x64xf32>
    %c0_17 = arith.constant 0 : index
    %c0_18 = arith.constant 0 : index
    %27 = vector.load %arg8[%c0_17, %c0_18] : memref<8x64xf32, #tpu.memory_space<vmem>>, vector<8x64xf32>
    tpu.vector_store %arg8[%c0_17, %c0_18], %26 {strides = array<i32>} : memref<8x64xf32, #tpu.memory_space<vmem>>, vector<8x64xf32>,
    return
  }
  func.func @transform_0(%arg0: i32) -> (i32, i32) {
    %c0_i32 = arith.constant 0 : i32
    %c0_i32_0 = arith.constant 0 : i32
    return %arg0, %c0_i32 : i32, i32
  }
  func.func @transform_1(%arg0: i32) -> (i32, i32) {
    %c0_i32 = arith.constant 0 : i32
    %c0_i32_0 = arith.constant 0 : i32
    %c0_i32_1 = arith.constant 0 : i32
    return %c0_i32, %c0_i32_0 : i32, i32
  }
  func.func @transform_2(%arg0: i32) -> (i32, i32) {
    %c0_i32 = arith.constant 0 : i32
    %c0_i32_0 = arith.constant 0 : i32
    %c0_i32_1 = arith.constant 0 : i32
    return %c0_i32, %c0_i32_0 : i32, i32
  }
  func.func @transform_3(%arg0: i32) -> (i32, i32) {
    %c0_i32 = arith.constant 0 : i32
    %c0_i32_0 = arith.constant 0 : i32
    %c0_i32_1 = arith.constant 0 : i32
    return %c0_i32, %c0_i32_0 : i32, i32
  }
  func.func @transform_4(%arg0: i32) -> (i32, i32) {
    %c0_i32 = arith.constant 0 : i32
    %c0_i32_0 = arith.constant 0 : i32
    %c0_i32_1 = arith.constant 0 : i32
    return %c0_i32, %c0_i32_0 : i32, i32
  }
  func.func @transform_5(%arg0: i32) -> (i32, i32) {
    %c0_i32 = arith.constant 0 : i32
    %c0_i32_0 = arith.constant 0 : i32
    %c0_i32_1 = arith.constant 0 : i32
    return %c0_i32, %c0_i32_0 : i32, i32
  }
  func.func @transform_6(%arg0: i32) -> (i32, i32) {
    %c0_i32 = arith.constant 0 : i32
    %c0_i32_0 = arith.constant 0 : i32
    %c0_i32_1 = arith.constant 0 : i32
    return %c0_i32, %c0_i32_0 : i32, i32
  }
  func.func @transform_7(%arg0: i32) -> (i32, i32) {
    %c0_i32 = arith.constant 0 : i32
    %c0_i32_0 = arith.constant 0 : i32
    return %arg0, %c0_i32 : i32, i32
  }
}

</mosaic_0001>

<llo_original>
// kernel: tpu_custom_call.1
$region0: #{tpu_custom_call.1}
  #allocation0 [shape = 'u32[]', space=smem, size = 0x4, offset = 0x4, fixed_abs, tag = 'smem constant byte address 0x4 - core index']
  #allocation1 [shape = 'u32[144,128]{1,0:T(1,128)}', space=vmem, size = 0x12000, scoped, tag = 'internal scratch']
  %s0 = inlined_call_operand.vmem [shape: f32[8,1], index: 0, kind: input, shape index: {}]
  %s1 = inlined_call_operand.vmem [shape: f32[1,128], index: 1, kind: input, shape index: {}]
  %s2 = inlined_call_operand.vmem [shape: f32[1,128], index: 2, kind: input, shape index: {}]
  %s3 = inlined_call_operand.vmem [shape: f32[128,128], index: 3, kind: input, shape index: {}]
  %s4 = inlined_call_operand.vmem [shape: f32[1,128], index: 4, kind: input, shape index: {}]
  %s5 = inlined_call_operand.vmem [shape: f32[128,64], index: 5, kind: input, shape index: {}]
  %s6 = inlined_call_operand.vmem [shape: f32[1,64], index: 6, kind: input, shape index: {}]
  %s7 = inlined_call_operand.hbm [shape: f32[8,64], index: 7, kind: output, shape index: {}]
  %s8 = sld [smem:[#allocation0]]
  $region38: #{tpu_custom_call.1} parent=0
    _
  %s10 = ssub.s32 1, %s8
  %s11 = scalar_select 0, %s10, %s8
  $region1: #{tpu_custom_call.1} parent=0
    #allocation2 [shape = 'u8[4096]{0}', space=vmem, size = 0x1000, scoped, tag = 'output window, operand 0, single buffered']
    #allocation3 [shape = 's32[1]{0}', space=sflag, size = 0x4, scoped, tag = 'scoped memory for tpu_custom_call.1']
    %12 = vsyncpa [#allocation3], 0
    // Predicated region
    $region2: #{tpu_custom_call.1} parent=1 // pred_check
      _
    $region3: #{tpu_custom_call.1} parent=1 // pred_check_branch
      %14 = sbr.rel (0) target = $region5
    $region4: #{tpu_custom_call.1} parent=1 // pred_region
      _
    $region5: #{tpu_custom_call.1} parent=1 // pred_fallthru
      _
    // Predicated region
    $region6: #{tpu_custom_call.1} parent=1 // pred_check
      _
    $region7: #{tpu_custom_call.1} parent=1 // pred_check_branch
      %16 = sbr.rel (0) target = $region9
    $region8: #{tpu_custom_call.1} parent=1 // pred_region
      _
    $region9: #{tpu_custom_call.1} parent=1 // pred_fallthru
      _
    // Predicated region
    $region10: #{tpu_custom_call.1} parent=1 // pred_check
      _
    $region11: #{tpu_custom_call.1} parent=1 // pred_check_branch
      %18 = sbr.rel (0) target = $region13
    $region12: #{tpu_custom_call.1} parent=1 // pred_region
      _
    $region13: #{tpu_custom_call.1} parent=1 // pred_fallthru
      _
    // Predicated region
    $region14: #{tpu_custom_call.1} parent=1 // pred_check
      _
    $region15: #{tpu_custom_call.1} parent=1 // pred_check_branch
      %20 = sbr.rel (0) target = $region17
    $region16: #{tpu_custom_call.1} parent=1 // pred_region
      _
    $region17: #{tpu_custom_call.1} parent=1 // pred_fallthru
      _
    // Predicated region
    $region18: #{tpu_custom_call.1} parent=1 // pred_check
      _
    $region19: #{tpu_custom_call.1} parent=1 // pred_check_branch
      %22 = sbr.rel (0) target = $region21
    $region20: #{tpu_custom_call.1} parent=1 // pred_region
      _
    $region21: #{tpu_custom_call.1} parent=1 // pred_fallthru
      _
    // Predicated region
    $region22: #{tpu_custom_call.1} parent=1 // pred_check
      _
    $region23: #{tpu_custom_call.1} parent=1 // pred_check_branch
      %24 = sbr.rel (0) target = $region25
    $region24: #{tpu_custom_call.1} parent=1 // pred_region
      _
    $region25: #{tpu_custom_call.1} parent=1 // pred_fallthru
      _
    // Predicated region
    $region26: #{tpu_custom_call.1} parent=1 // pred_check
      _
    $region27: #{tpu_custom_call.1} parent=1 // pred_check_branch
      %26 = sbr.rel (0) target = $region29
    $region28: #{tpu_custom_call.1} parent=1 // pred_region
      _
    $region29: #{tpu_custom_call.1} parent=1 // pred_fallthru
      _
    %v27 = vld [vmem:[%s0] sm:$0xff]
    %v28 = vld [vmem:[%s1] sm:$0x1]
    %30 = vset.pattern.permute.xlu0 0
    %31 = vperm.xlu0 %30, %v27
    %v32 = vpop.permute.xlu0 %31
    %v35 = vlaneseq
    %v36 = vshrl.u32 %v35, 7
    %v37 = vsub.s32 0, %v36
    %v38 = vrot.slane %v28, %v37
    %v40 = vmul.f32 %v32, %v38
    %v41 = vld [vmem:[%s2] sm:$0x1]
    %v43 = vlaneseq
    %v44 = vshrl.u32 %v43, 7
    %v45 = vsub.s32 0, %v44
    %v46 = vrot.slane %v41, %v45
    %v48 = vadd.f32 %v40, %v46
    %v49 = vmax.f32 %v48, 0.0
    %v50 = vld [vmem:[%s3] sm:$0xff]
    %v51 = vld [vmem:[%s3 + $0x8] sm:$0xff]
    %v52 = vld [vmem:[%s3 + $0x10] sm:$0xff]
    %v53 = vld [vmem:[%s3 + $0x18] sm:$0xff]
    %v54 = vld [vmem:[%s3 + $0x20] sm:$0xff]
    %v55 = vld [vmem:[%s3 + $0x28] sm:$0xff]
    %v56 = vld [vmem:[%s3 + $0x30] sm:$0xff]
    %v57 = vld [vmem:[%s3 + $0x38] sm:$0xff]
    %v58 = vld [vmem:[%s3 + $0x40] sm:$0xff]
    %v59 = vld [vmem:[%s3 + $0x48] sm:$0xff]
    %v60 = vld [vmem:[%s3 + $0x50] sm:$0xff]
    %v61 = vld [vmem:[%s3 + $0x58] sm:$0xff]
    %v62 = vld [vmem:[%s3 + $0x60] sm:$0xff]
    %v63 = vld [vmem:[%s3 + $0x68] sm:$0xff]
    %v64 = vld [vmem:[%s3 + $0x70] sm:$0xff]
    %v65 = vld [vmem:[%s3 + $0x78] sm:$0xff]
    %v66 = vld [vmem:[%s4] sm:$0x1]
    %v68 = vlaneseq
    %v69 = vshrl.u32 %v68, 7
    %v70 = vsub.s32 0, %v69
    %v71 = vrot.slane %v66, %v70
    %73 = vmatprep.subr.mxu0 0.0
    %74 = vmatpush1.msra.mxu0 %v50
    %75 = vmatprep.subr.mxu0 0.0
    %76 = vmatpush1.msra.mxu0 %v51
    %77 = vmatprep.subr.mxu0 0.0
    %78 = vmatpush1.msra.mxu0 %v52
    %79 = vmatprep.subr.mxu0 0.0
    %80 = vmatpush1.msra.mxu0 %v53
    %81 = vmatprep.subr.mxu0 0.0
    %82 = vmatpush1.msra.mxu0 %v54
    %83 = vmatprep.subr.mxu0 0.0
    %84 = vmatpush1.msra.mxu0 %v55
    %85 = vmatprep.subr.mxu0 0.0
    %86 = vmatpush1.msra.mxu0 %v56
    %87 = vmatprep.subr.mxu0 0.0
    %88 = vmatpush1.msra.mxu0 %v57
    %89 = vmatprep.subr.mxu0 0.0
    %90 = vmatpush1.msra.mxu0 %v58
    %91 = vmatprep.subr.mxu0 0.0
    %92 = vmatpush1.msra.mxu0 %v59
    %93 = vmatprep.subr.mxu0 0.0
    %94 = vmatpush1.msra.mxu0 %v60
    %95 = vmatprep.subr.mxu0 0.0
    %96 = vmatpush1.msra.mxu0 %v61
    %97 = vmatprep.subr.mxu0 0.0
    %98 = vmatpush1.msra.mxu0 %v62
    %99 = vmatprep.subr.mxu0 0.0
    %100 = vmatpush1.msra.mxu0 %v63
    %101 = vmatprep.subr.mxu0 0.0
    %102 = vmatpush1.msra.mxu0 %v64
    %103 = vmatprep.subr.mxu0 0.0
    %104 = vmatpush1.msra.mxu0 %v65
    %105 = vmatprep.subr.mxu0 0.0
    %106 = vmatpush1.msra.mxu0 0.0
    %107 = vmatprep.subr.mxu0 0.0
    %108 = vmatpush1.msra.mxu0 0.0
    %109 = vmatprep.subr.mxu0 0.0
    %110 = vmatpush1.msra.mxu0 0.0
    %111 = vmatprep.subr.mxu0 0.0
    %112 = vmatpush1.msra.mxu0 0.0
    %113 = vmatprep.subr.mxu0 0.0
    %114 = vmatpush1.msra.mxu0 0.0
    %115 = vmatprep.subr.mxu0 0.0
    %116 = vmatpush1.msra.mxu0 0.0
    %117 = vmatprep.subr.mxu0 0.0
    %118 = vmatpush1.msra.mxu0 0.0
    %119 = vmatprep.subr.mxu0 0.0
    %120 = vmatpush1.msra.mxu0 0.0
    %121 = vmatprep.subr.mxu0 0.0
    %122 = vmatpush1.msra.mxu0 0.0
    %123 = vmatprep.subr.mxu0 0.0
    %124 = vmatpush1.msra.mxu0 0.0
    %125 = vmatprep.subr.mxu0 0.0
    %126 = vmatpush1.msra.mxu0 0.0
    %127 = vmatprep.subr.mxu0 0.0
    %128 = vmatpush1.msra.mxu0 0.0
    %129 = vmatprep.subr.mxu0 0.0
    %130 = vmatpush1.msra.mxu0 0.0
    %131 = vmatprep.subr.mxu0 0.0
    %132 = vmatpush1.msra.mxu0 0.0
    %133 = vmatprep.subr.mxu0 0.0
    %134 = vmatpush1.msra.mxu0 0.0
    %135 = vmatprep.subr.mxu0 0.0
    %136 = vmatpush1.msra.mxu0 0.0
    %137 = vmatprep.mubr.f32.mxu0 0.0
    %138 = vmatmul.mubr.f32.gmra.mrb[0].mxu0 %v49
    %v139 = vpop.f32.mrb[0].mxu0
    %v140 = vadd.f32 %v71, %v139
    %v141 = vpop.f32.mrb[0].mxu0
    %142 = vdwg.mxu0
    %v143 = vmax.f32 %v140, 0.0
    %v144 = vld [vmem:[%s5] sm:$0xff]
    %v145 = vld [vmem:[%s5 + $0x8] sm:$0xff]
    %v146 = vld [vmem:[%s5 + $0x10] sm:$0xff]
    %v147 = vld [vmem:[%s5 + $0x18] sm:$0xff]
    %v148 = vld [vmem:[%s5 + $0x20] sm:$0xff]
    %v149 = vld [vmem:[%s5 + $0x28] sm:$0xff]
    %v150 = vld [vmem:[%s5 + $0x30] sm:$0xff]
    %v151 = vld [vmem:[%s5 + $0x38] sm:$0xff]
    %v152 = vld [vmem:[%s5 + $0x40] sm:$0xff]
    %v153 = vld [vmem:[%s5 + $0x48] sm:$0xff]
    %v154 = vld [vmem:[%s5 + $0x50] sm:$0xff]
    %v155 = vld [vmem:[%s5 + $0x58] sm:$0xff]
    %v156 = vld [vmem:[%s5 + $0x60] sm:$0xff]
    %v157 = vld [vmem:[%s5 + $0x68] sm:$0xff]
    %v158 = vld [vmem:[%s5 + $0x70] sm:$0xff]
    %v159 = vld [vmem:[%s5 + $0x78] sm:$0xff]
    %v160 = vld [vmem:[%s6] sm:$0x1]
    %v162 = vlaneseq
    %v163 = vshrl.u32 %v162, 7
    %v164 = vsub.s32 0, %v163
    %v165 = vrot.slane %v160, %v164
    %167 = vmatprep.subr.mxu0 0.0
    %168 = vmatpush1.msra.mxu0 %v144
    %169 = vmatprep.subr.mxu0 0.0
    %170 = vmatpush1.msra.mxu0 %v145
    %171 = vmatprep.subr.mxu0 0.0
    %172 = vmatpush1.msra.mxu0 %v146
    %173 = vmatprep.subr.mxu0 0.0
    %174 = vmatpush1.msra.mxu0 %v147
    %175 = vmatprep.subr.mxu0 0.0
    %176 = vmatpush1.msra.mxu0 %v148
    %177 = vmatprep.subr.mxu0 0.0
    %178 = vmatpush1.msra.mxu0 %v149
    %179 = vmatprep.subr.mxu0 0.0
    %180 = vmatpush1.msra.mxu0 %v150
    %181 = vmatprep.subr.mxu0 0.0
    %182 = vmatpush1.msra.mxu0 %v151
    %183 = vmatprep.subr.mxu0 0.0
    %184 = vmatpush1.msra.mxu0 %v152
    %185 = vmatprep.subr.mxu0 0.0
    %186 = vmatpush1.msra.mxu0 %v153
    %187 = vmatprep.subr.mxu0 0.0
    %188 = vmatpush1.msra.mxu0 %v154
    %189 = vmatprep.subr.mxu0 0.0
    %190 = vmatpush1.msra.mxu0 %v155
    %191 = vmatprep.subr.mxu0 0.0
    %192 = vmatpush1.msra.mxu0 %v156
    %193 = vmatprep.subr.mxu0 0.0
    %194 = vmatpush1.msra.mxu0 %v157
    %195 = vmatprep.subr.mxu0 0.0
    %196 = vmatpush1.msra.mxu0 %v158
    %197 = vmatprep.subr.mxu0 0.0
    %198 = vmatpush1.msra.mxu0 %v159
    %199 = vmatprep.subr.mxu0 0.0
    %200 = vmatpush1.msra.mxu0 0.0
    %201 = vmatprep.subr.mxu0 0.0
    %202 = vmatpush1.msra.mxu0 0.0
    %203 = vmatprep.subr.mxu0 0.0
    %204 = vmatpush1.msra.mxu0 0.0
    %205 = vmatprep.subr.mxu0 0.0
    %206 = vmatpush1.msra.mxu0 0.0
    %207 = vmatprep.subr.mxu0 0.0
    %208 = vmatpush1.msra.mxu0 0.0
    %209 = vmatprep.subr.mxu0 0.0
    %210 = vmatpush1.msra.mxu0 0.0
    %211 = vmatprep.subr.mxu0 0.0
    %212 = vmatpush1.msra.mxu0 0.0
    %213 = vmatprep.subr.mxu0 0.0
    %214 = vmatpush1.msra.mxu0 0.0
    %215 = vmatprep.subr.mxu0 0.0
    %216 = vmatpush1.msra.mxu0 0.0
    %217 = vmatprep.subr.mxu0 0.0
    %218 = vmatpush1.msra.mxu0 0.0
    %219 = vmatprep.subr.mxu0 0.0
    %220 = vmatpush1.msra.mxu0 0.0
    %221 = vmatprep.subr.mxu0 0.0
    %222 = vmatpush1.msra.mxu0 0.0
    %223 = vmatprep.subr.mxu0 0.0
    %224 = vmatpush1.msra.mxu0 0.0
    %225 = vmatprep.subr.mxu0 0.0
    %226 = vmatpush1.msra.mxu0 0.0
    %227 = vmatprep.subr.mxu0 0.0
    %228 = vmatpush1.msra.mxu0 0.0
    %229 = vmatprep.subr.mxu0 0.0
    %230 = vmatpush1.msra.mxu0 0.0
    %231 = vmatprep.mubr.f32.mxu0 0.0
    %232 = vmatmul.mubr.f32.gmra.mrb[0].mxu0 %v143
    %v233 = vpop.f32.mrb[0].mxu0
    %v234 = vadd.f32 %v165, %v233
    %v235 = vpop.f32.mrb[0].mxu0
    %236 = vdwg.mxu0
    %v237 = vxor.u32 %v234, 2147483648
    %v238 = vmul.f32 %v237, 1.442695
    %v239 = vpow.pop %v238
    %v240 = vadd.f32 %v239, 1.0
    %v241 = vrcp.pop %v240
    %v242 = vmul.f32 1.0, %v241
    %vm243 = vcmask 523264
    %244 = vst.msk [vmem:[#allocation2] sm:$0xff] %vm243, %v242
    // Predicated region
    $region30: #{tpu_custom_call.1} parent=1 // pred_check
      _
    $region31: #{tpu_custom_call.1} parent=1 // pred_check_branch
      %246 = sbr.rel (0) target = $region33
    $region32: #{tpu_custom_call.1} parent=1 // pred_region
      %s248 = ssub.s32 128, 128
      %249 = vsyncadd [#allocation3], %s248
      %s251 = sshll.u32 [#allocation2], 4
      %s252 = int_to_ptr.vmem [resolvable:$true] %s251
      %254 = dma.vmem_to_hbm [thread:$0]  %s252, 128, %s7, [#allocation3]
    $region33: #{tpu_custom_call.1} parent=1 // pred_fallthru
      _
    // Predicated region
    $region34: #{tpu_custom_call.1} parent=1 // pred_check
      _
    $region35: #{tpu_custom_call.1} parent=1 // pred_check_branch
      %256 = sbr.rel (0) target = $region37
    $region36: #{tpu_custom_call.1} parent=1 // pred_region
      %257 = dma.done [#allocation3], 128
    $region37: #{tpu_custom_call.1} parent=1 // pred_fallthru
      _
    %258 = vsyncpa [#allocation3], 1

</llo_original>
